<compile_context>
chip_gen: v7x
topology: tpu7x:2x2x1
jax: 0.10.0
libtpu: 0.0.40
codegen_flags: <defaults>
</compile_context>

<pallas_src>
import jax
import jax.numpy as jnp
from jax.experimental import pallas as pl
from jax.experimental.pallas import tpu as pltpu


def _round_up(x, m):
    return (x + m - 1) // m * m


def _cdiv(a, b):
    return (a + b - 1) // b


def _tpu_config():
    """Per-generation tile defaults + physical VMEM (per TensorCore)."""
    kind = ""
    try:
        kind = jax.devices()[0].device_kind.lower()
    except Exception:
        pass
    if "v7" in kind:
        cfg = dict(tm=512, tf=256, lane=256, num_tc=2, vmem_phys=64 << 20)
    elif "v6" in kind:
        cfg = dict(tm=768, tf=512, lane=256, num_tc=1, vmem_phys=128 << 20)
    elif "v5" in kind:
        cfg = dict(tm=256, tf=512, lane=128, num_tc=1, vmem_phys=128 << 20)
    else:
        # Unknown chip: conservative small-VMEM, possibly multi-core defaults.
        cfg = dict(tm=512, tf=256, lane=128, num_tc=2, vmem_phys=64 << 20)
    try:
        cfg["vmem_phys"] = int(pltpu.get_tpu_info().vmem_capacity_bytes)
    except Exception:
        pass  # keep table fallback
    return cfg


def _vmem_estimate(tm, tf, d_model_p, esz):
    """Double-buffered I/O blocks + f32 accumulator + implicit (tm, tf) hidden
    temporaries (f32 result + downcast copy) + compiler-scratch headroom."""
    io = 2 * esz * (tm * d_model_p                  # x tile
                    + tm * d_model_p                # out tile
                    + d_model_p * tf + tf           # w1, b1 blocks
                    + tf * d_model_p + d_model_p)   # w2, b2 blocks
    acc = 4 * tm * d_model_p                        # f32 accumulator scratch
    hidden = tm * tf * (4 + esz)                    # h (f32) + h.astype(w2.dtype)
    return io + acc + hidden + (6 << 20)


def ffn_kernel(x_ref, w1_ref, b1_ref, w2_ref, b2_ref, o_ref, acc_ref):
    """One (TM, d_model) output tile, accumulated over d_ff blocks (grid axis 1)."""
    f = pl.program_id(1)

    @pl.when(f == 0)
    def _():
        acc_ref[...] = jnp.zeros_like(acc_ref)

    x = x_ref[...]
    # Hidden projection for this d_ff block + SiLU (MXU dot, f32 accumulate;
    # SiLU stays in f32 on the VPU/EUP).
    h = jnp.dot(x, w1_ref[...], preferred_element_type=jnp.float32) + b1_ref[...]
    h = h * jax.nn.sigmoid(h)  # SiLU
    # Partial output projection; downcast h so the second matmul's LHS matches
    # the (possibly bf16) weight dtype. Keep the += fused on the dot result so
    # Mosaic can use the v7x MRB in-place accumulate.
    acc_ref[...] += jnp.dot(h.astype(w2_ref.dtype), w2_ref[...],
                            preferred_element_type=jnp.float32)

    @pl.when(f == pl.num_programs(1) - 1)
    def _():
        o_ref[...] = (acc_ref[...] + b2_ref[...]).astype(o_ref.dtype)


def make_feed_forward(w1, b1, w2, b2, *, tm=None, tf=None):
    """Pre-pads weights once (parameter-load time) and returns x -> ffn(x)."""
    d_model, d_ff = w1.shape
    wdtype = w1.dtype
    esz = jnp.dtype(wdtype).itemsize
    sublane = max(8, 32 // esz)          # 8 for f32, 16 for bf16, 32 for int8/fp8

    cfg = _tpu_config()
    lane = cfg["lane"]
    num_tc = cfg["num_tc"]
    vmem_cap = max(16 << 20, cfg["vmem_phys"] - (8 << 20))   # physical minus headroom

    tm = cfg["tm"] if tm is None else tm
    tf = cfg["tf"] if tf is None else tf
    tm = _round_up(tm, sublane)
    tf = min(_round_up(tf, 128), _round_up(d_ff, 128))

    d_model_p = _round_up(d_model, lane)   # 256-aligned on v6e/v7x, 128 on v5e

    # Auto-fit: shrink TF first (does not change HBM traffic), then TM (the
    # intensity knob), until the footprint fits physical VMEM.
    while _vmem_estimate(tm, tf, d_model_p, esz) > vmem_cap:
        if tf > 128:
            tf //= 2
        elif tm > sublane:
            tm = max(sublane, _round_up(tm // 2, sublane))
        else:
            break

    d_ff_p = _round_up(d_ff, tf)

    # Pad weights ONCE, outside the per-call hot path. Zero padding is inert:
    # silu(0) = 0 and the padded w2 rows/columns are zero.
    w1_p = jnp.pad(w1, ((0, d_model_p - d_model), (0, d_ff_p - d_ff)))
    b1_p = jnp.pad(jnp.reshape(b1, (1, d_ff)), ((0, 0), (0, d_ff_p - d_ff)))
    w2_p = jnp.pad(w2, ((0, d_ff_p - d_ff), (0, d_model_p - d_model)))
    b2_p = jnp.pad(jnp.reshape(b2, (1, d_model)), ((0, 0), (0, d_model_p - d_model)))

    base_tm, base_tf = tm, tf

    def apply(x):
        batch, seq, dm = x.shape
        assert dm == d_model, (dm, d_model)
        m = batch * seq

        tm_eff = min(base_tm, _round_up(m, sublane))
        # Multi-TC chips (v7x): the "parallel" token axis is what gets sharded
        # across TensorCores -- give it at least 2 steps when m allows.
        if num_tc >= 2 and _cdiv(m, tm_eff) < 2 and m > sublane:
            tm_eff = max(sublane, _round_up(_cdiv(m, 2), sublane))
        m_p = _round_up(m, tm_eff)

        x2d = x.reshape(m, d_model)
        if m_p == m and d_model_p == d_model:
            x_p = x2d                       # skip the pad when already aligned
        else:
            x_p = jnp.pad(x2d, ((0, m_p - m), (0, d_model_p - d_model)))

        vmem_bytes = int(max(16 << 20,
                             min(_vmem_estimate(tm_eff, base_tf, d_model_p, esz),
                                 vmem_cap)))
        grid = (m_p // tm_eff, d_ff_p // base_tf)

        out_p = pl.pallas_call(
            ffn_kernel,
            out_shape=jax.ShapeDtypeStruct((m_p, d_model_p), x.dtype),
            grid_spec=pltpu.PrefetchScalarGridSpec(
                num_scalar_prefetch=0,
                grid=grid,
                in_specs=[
                    pl.BlockSpec((tm_eff, d_model_p), lambda i, f: (i, 0)),   # x tile
                    pl.BlockSpec((d_model_p, base_tf), lambda i, f: (0, f)),  # w1 block
                    pl.BlockSpec((1, base_tf), lambda i, f: (0, f)),          # b1 block
                    pl.BlockSpec((base_tf, d_model_p), lambda i, f: (f, 0)),  # w2 block
                    pl.BlockSpec((1, d_model_p), lambda i, f: (0, 0)),        # b2 (resident)
                ],
                out_specs=pl.BlockSpec((tm_eff, d_model_p), lambda i, f: (i, 0)),
                scratch_shapes=[pltpu.VMEM((tm_eff, d_model_p), jnp.float32)],
            ),
            compiler_params=pltpu.CompilerParams(
                dimension_semantics=("parallel", "arbitrary"),
                vmem_limit_bytes=vmem_bytes,
            ),
        )(x_p, w1_p, b1_p, w2_p, b2_p)

        return out_p[:m, :d_model].reshape(batch, seq, d_model)

    return apply


def feed_forward(x, w1, b1, w2, b2, **kw):
    """Convenience one-shot wrapper (prefer make_feed_forward for repeated use)."""
    return make_feed_forward(w1, b1, w2, b2, **kw)(x)


def init_params(key, d_model, d_ff, dtype=jnp.float32):
    # Deterministic init mimicking nn.Linear's U(-1/sqrt(fan_in), 1/sqrt(fan_in)).
    k1, k2, k3, k4 = jax.random.split(key, 4)
    lim1 = 1.0 / (d_model ** 0.5)
    lim2 = 1.0 / (d_ff ** 0.5)
    w1 = jax.random.uniform(k1, (d_model, d_ff), dtype, -lim1, lim1)
    b1 = jax.random.uniform(k2, (d_ff,), dtype, -lim1, lim1)
    w2 = jax.random.uniform(k3, (d_ff, d_model), dtype, -lim2, lim2)
    b2 = jax.random.uniform(k4, (d_model,), dtype, -lim2, lim2)
    return w1, b1, w2, b2


def feed_forward_ref(x, w1, b1, w2, b2):
    h = jnp.dot(x, w1) + b1
    h = h * jax.nn.sigmoid(h)
    return jnp.dot(h, w2) + b2


if __name__ == "__main__":
    # NOTE: for production use feed the kernel bf16 activations/weights (the f32
    # accumulator keeps numerics); f32 here only so the 1e-5 reference check holds.
    batch, seq, d_model, d_ff = 2, 8, 32, 64
    key = jax.random.PRNGKey(0)
    kx, kp = jax.random.split(key)
    x = jax.random.normal(kx, (batch, seq, d_model), jnp.float32)
    w1, b1, w2, b2 = init_params(kp, d_model, d_ff, jnp.float32)

    ffn = make_feed_forward(w1, b1, w2, b2)
    out = jax.block_until_ready(ffn(x))

    ref = feed_forward_ref(x, w1, b1, w2, b2)
    assert out.shape == (batch, seq, d_model)
    assert jnp.allclose(out, ref, atol=1e-5, rtol=1e-5), \
        float(jnp.max(jnp.abs(out - ref)))
    print("KERNEL_OK")
</pallas_src>

<mosaic_0001>
module attributes {stable_mosaic.version = 11 : i64} {
  func.func @ffn_kernel(%arg0: i32, %arg1: i32, %arg2: memref<8x128xf32, #tpu.memory_space<vmem>>, %arg3: memref<128x128xf32, #tpu.memory_space<vmem>>, %arg4: memref<1x128xf32, #tpu.memory_space<vmem>>, %arg5: memref<128x128xf32, #tpu.memory_space<vmem>>, %arg6: memref<1x128xf32, #tpu.memory_space<vmem>>, %arg7: memref<8x128xf32, #tpu.memory_space<vmem>>, %arg8: memref<8x128xf32, #tpu.memory_space<vmem>>) attributes {dimension_semantics = [#tpu.dimension_semantics<parallel>, #tpu.dimension_semantics<arbitrary>], iteration_bounds = array<i64: 2, 1>, scalar_prefetch = 0 : i64, scratch_operands = 1 : i64, tpu.core_type = #tpu.core_type<tc>, window_params = [{transform_indices = @transform_0, window_bounds = array<i64: 8, 128>}, {transform_indices = @transform_1, window_bounds = array<i64: 128, 128>}, {transform_indices = @transform_2, window_bounds = array<i64: 1, 128>}, {transform_indices = @transform_3, window_bounds = array<i64: 128, 128>}, {pipeline_mode = #tpu.pipeline_mode<synchronous>, transform_indices = @transform_4, window_bounds = array<i64: 1, 128>}, {transform_indices = @transform_5, window_bounds = array<i64: 8, 128>}]} {
    %c0_i32 = arith.constant 0 : i32
    %0 = arith.cmpi eq, %arg1, %c0_i32 : i32
    %1 = arith.extui %0 : i1 to i32
    %c0_i32_0 = arith.constant 0 : i32
    %2 = arith.cmpi ne, %1, %c0_i32_0 : i32
    scf.if %2 {
      %cst_16 = arith.constant 0.000000e+00 : f32
      %23 = vector.broadcast %cst_16 : f32 to vector<8x128xf32>
      %c0_17 = arith.constant 0 : index
      %c0_18 = arith.constant 0 : index
      %24 = vector.load %arg8[%c0_17, %c0_18] : memref<8x128xf32, #tpu.memory_space<vmem>>, vector<8x128xf32>
      tpu.vector_store %arg8[%c0_17, %c0_18], %23 {strides = array<i32>} : memref<8x128xf32, #tpu.memory_space<vmem>>, vector<8x128xf32>,
    } else {
    }
    %c0 = arith.constant 0 : index
    %c0_1 = arith.constant 0 : index
    %3 = vector.load %arg2[%c0, %c0_1] : memref<8x128xf32, #tpu.memory_space<vmem>>, vector<8x128xf32>
    %c0_2 = arith.constant 0 : index
    %c0_3 = arith.constant 0 : index
    %4 = vector.load %arg3[%c0_2, %c0_3] : memref<128x128xf32, #tpu.memory_space<vmem>>, vector<128x128xf32>
    %cst = arith.constant dense<0.000000e+00> : vector<8x128xf32>
    %5 = tpu.matmul %3, %4, %cst {dimension_numbers = #tpu.dot_dimension_numbers<[1], [0], [0], [1], [0, 0, 1, 1], [], []>} : vector<8x128xf32>, vector<128x128xf32>, vector<8x128xf32> -> vector<8x128xf32>
    %c0_4 = arith.constant 0 : index
    %c0_5 = arith.constant 0 : index
    %6 = vector.load %arg4[%c0_4, %c0_5] : memref<1x128xf32, #tpu.memory_space<vmem>>, vector<1x128xf32>
    %7 = vector.broadcast %6 : vector<1x128xf32> to vector<8x128xf32>
    %8 = arith.addf %5, %7 : vector<8x128xf32>
    %9 = arith.negf %8 : vector<8x128xf32>
    %10 = math.exp %9 : vector<8x128xf32>
    %cst_6 = arith.constant 1.000000e+00 : f32
    %11 = vector.broadcast %cst_6 : f32 to vector<8x128xf32>
    %12 = arith.addf %11, %10 : vector<8x128xf32>
    %13 = arith.divf %11, %12 : vector<8x128xf32>
    %14 = arith.mulf %8, %13 : vector<8x128xf32>
    %c0_7 = arith.constant 0 : index
    %c0_8 = arith.constant 0 : index
    %15 = vector.load %arg8[%c0_7, %c0_8] : memref<8x128xf32, #tpu.memory_space<vmem>>, vector<8x128xf32>
    %c0_9 = arith.constant 0 : index
    %c0_10 = arith.constant 0 : index
    %16 = vector.load %arg5[%c0_9, %c0_10] : memref<128x128xf32, #tpu.memory_space<vmem>>, vector<128x128xf32>
    %cst_11 = arith.constant dense<0.000000e+00> : vector<8x128xf32>
    %17 = tpu.matmul %14, %16, %cst_11 {dimension_numbers = #tpu.dot_dimension_numbers<[1], [0], [0], [1], [0, 0, 1, 1], [], []>} : vector<8x128xf32>, vector<128x128xf32>, vector<8x128xf32> -> vector<8x128xf32>
    %18 = arith.addf %15, %17 : vector<8x128xf32>
    %c0_12 = arith.constant 0 : index
    %c0_13 = arith.constant 0 : index
    %19 = vector.load %arg8[%c0_12, %c0_13] : memref<8x128xf32, #tpu.memory_space<vmem>>, vector<8x128xf32>
    tpu.vector_store %arg8[%c0_12, %c0_13], %18 {strides = array<i32>} : memref<8x128xf32, #tpu.memory_space<vmem>>, vector<8x128xf32>,
    %c0_i32_14 = arith.constant 0 : i32
    %20 = arith.cmpi eq, %arg1, %c0_i32_14 : i32
    %21 = arith.extui %20 : i1 to i32
    %c0_i32_15 = arith.constant 0 : i32
    %22 = arith.cmpi ne, %21, %c0_i32_15 : i32
    scf.if %22 {
      %c0_16 = arith.constant 0 : index
      %c0_17 = arith.constant 0 : index
      %23 = vector.load %arg8[%c0_16, %c0_17] : memref<8x128xf32, #tpu.memory_space<vmem>>, vector<8x128xf32>
      %c0_18 = arith.constant 0 : index
      %c0_19 = arith.constant 0 : index
      %24 = vector.load %arg6[%c0_18, %c0_19] : memref<1x128xf32, #tpu.memory_space<vmem>>, vector<1x128xf32>
      %25 = vector.broadcast %24 : vector<1x128xf32> to vector<8x128xf32>
      %26 = arith.addf %23, %25 : vector<8x128xf32>
      %c0_20 = arith.constant 0 : index
      %c0_21 = arith.constant 0 : index
      %27 = vector.load %arg7[%c0_20, %c0_21] : memref<8x128xf32, #tpu.memory_space<vmem>>, vector<8x128xf32>
      tpu.vector_store %arg7[%c0_20, %c0_21], %26 {strides = array<i32>} : memref<8x128xf32, #tpu.memory_space<vmem>>, vector<8x128xf32>,
    } else {
    }
    return
  }
  func.func @transform_0(%arg0: i32, %arg1: i32) -> (i32, i32) {
    %c0_i32 = arith.constant 0 : i32
    %c0_i32_0 = arith.constant 0 : i32
    return %arg0, %c0_i32 : i32, i32
  }
  func.func @transform_1(%arg0: i32, %arg1: i32) -> (i32, i32) {
    %c0_i32 = arith.constant 0 : i32
    %c0_i32_0 = arith.constant 0 : i32
    return %c0_i32, %arg1 : i32, i32
  }
  func.func @transform_2(%arg0: i32, %arg1: i32) -> (i32, i32) {
    %c0_i32 = arith.constant 0 : i32
    %c0_i32_0 = arith.constant 0 : i32
    return %c0_i32, %arg1 : i32, i32
  }
  func.func @transform_3(%arg0: i32, %arg1: i32) -> (i32, i32) {
    %c0_i32 = arith.constant 0 : i32
    %c0_i32_0 = arith.constant 0 : i32
    return %arg1, %c0_i32 : i32, i32
  }
  func.func @transform_4(%arg0: i32, %arg1: i32) -> (i32, i32) {
    %c0_i32 = arith.constant 0 : i32
    %c0_i32_0 = arith.constant 0 : i32
    %c0_i32_1 = arith.constant 0 : i32
    return %c0_i32, %c0_i32_0 : i32, i32
  }
  func.func @transform_5(%arg0: i32, %arg1: i32) -> (i32, i32) {
    %c0_i32 = arith.constant 0 : i32
    %c0_i32_0 = arith.constant 0 : i32
    return %arg0, %c0_i32 : i32, i32
  }
}

</mosaic_0001>

<llo_original>
// kernel: tpu_custom_call.1
$region0: #{tpu_custom_call.1}
  #allocation0 [shape = 'u32[]', space=smem, size = 0x4, offset = 0x4, fixed_abs, tag = 'smem constant byte address 0x4 - core index']
  #allocation1 [shape = 'u32[144,128]{1,0:T(1,128)}', space=vmem, size = 0x12000, scoped, tag = 'internal scratch']
  #allocation2 [shape = 'f32[8,128]{1,0:T(8,128)}', space=vmem, size = 0x1000, scoped, tag = 'scratch operand']
  %s0 = inlined_call_operand.hbm [shape: f32[16,128], index: 0, kind: input, shape index: {}]
  %s1 = inlined_call_operand.hbm [shape: f32[128,128], index: 1, kind: input, shape index: {}]
  %s2 = inlined_call_operand.vmem [shape: f32[1,128], index: 2, kind: input, shape index: {}]
  %s3 = inlined_call_operand.hbm [shape: f32[128,128], index: 3, kind: input, shape index: {}]
  %s4 = inlined_call_operand.vmem [shape: f32[1,128], index: 4, kind: input, shape index: {}]
  %s5 = inlined_call_operand.hbm [shape: f32[16,128], index: 5, kind: output, shape index: {}]
  %s6 = sld [smem:[#allocation0]]
  $region73: #{tpu_custom_call.1} parent=0
    _
  %s8 = ssub.s32 1, %s6
  %s9 = scalar_select 0, %s8, %s6
  $region1: #{tpu_custom_call.1} parent=0
    #allocation3 [shape = 'u8[8192]{0}', space=vmem, size = 0x2000, scoped, tag = 'input window, operand 0']
    #allocation4 [shape = 's32[2]{0}', space=sflag, size = 0x8, scoped, tag = 'scoped memory for tpu_custom_call.1']
    #allocation5 [shape = 's32[2]{0}', space=sflag, size = 0x8, scoped, tag = 'scoped memory for tpu_custom_call.1']
    #allocation6 [shape = 'u8[65536]{0}', space=vmem, size = 0x10000, scoped, tag = 'input window, operand 1, single buffered']
    #allocation7 [shape = 's32[1]{0}', space=sflag, size = 0x4, scoped, tag = 'scoped memory for tpu_custom_call.1']
    #allocation8 [shape = 'u8[65536]{0}', space=vmem, size = 0x10000, scoped, tag = 'input window, operand 3, single buffered']
    #allocation9 [shape = 'u8[8192]{0}', space=vmem, size = 0x2000, scoped, tag = 'output window, operand 0']
    %10 = vsyncpa [#allocation4], 0
    %s11 = scalar_lea.sflag [#allocation4], 1
    %12 = vsyncpa %s11, 0
    %13 = vsyncpa [#allocation7], 0
    %14 = vsyncpa [#allocation5], 0
    %s15 = scalar_lea.sflag [#allocation5], 1
    %16 = vsyncpa %s15, 0
    loop: start=0, step=1, limit=4
    $region2: #{tpu_custom_call.1} parent=1 // loop_pre_header
      _
    $region3: #{tpu_custom_call.1} parent=1 // loop_header
      %s18 = sphi 0, %s22
      %p19 = scmp.ge.s32.totalorder %s18, 4
      %s25 = sphi 0, %s37
      %s26 = sphi 0, %s33
      %s27 = sphi 0, %s25
      %s28 = sphi 0, %s26
      %s29 = sphi 0, %s27
      %s30 = sphi 0, %s28
      %s40 = sphi 0, %s42
      %s43 = sphi 0, %s40
      %s44 = sphi 0, %s43
      %s60 = sphi 0, %s44
      %s66 = sphi 0, %s68
      %s69 = sphi 0, %s66
      %s70 = sphi 0, %s69
      %s86 = sphi 0, %s70
      %s92 = sphi 0, %s94
      %s95 = sphi 0, %s92
      %s96 = sphi 0, %s95
      %s112 = sphi 0, %s96
      %s118 = sphi 0, %s120
      %s121 = sphi 0, %s118
      %s122 = sphi 0, %s121
      %s138 = sphi 0, %s122
      %s142 = sphi 0, %s142
      %s144 = sphi 0, %s142
      %s145 = sphi 0, %s144
      %s159 = sphi 0, %s145
      %s165 = sphi 0, %s167
      %s168 = sphi 0, %s165
      %s169 = sphi 0, %s168
      %s185 = sphi 0, %s169
    $region4: #{tpu_custom_call.1} parent=1 // loop_header_branch
      %21 = sbr.rel (%p19) target = $region8
    $region5: #{tpu_custom_call.1} parent=1 // loop_body
      %s23 = ssub.s32 %s18, 1
      %s24 = ssub.s32 %s18, 2
      %s31 = sadd.s32 1, %s26
      %p32 = scmp.ge.s32.totalorder %s31, 1
      %s33 = scalar_select %p32, 0, %s31
      %s34 = sadd.s32 1, %s25
      %s35 = scalar_select %p32, %s34, %s25
      %p36 = scmp.ge.s32.totalorder %s35, 2
      %s37 = scalar_select %p36, 0, %s35
      %s38 = ssub.s32 %s25, %s37
      %p39 = scmp.eq.s32.totalorder %s38, 0
      %s41 = sadd.s32 %s40, 1
      %s42 = scalar_select %p39, %s40, %s41
      %p45 = pneg %p39
      %p46 = scmp.eq.s32.totalorder %s18, 1
      %p47 = por %p45, %p46
      %p48 = scmp.ne.s32.totalorder %s40, %s43
      %p49 = scmp.eq.s32.totalorder %s18, 0
      %p50 = por %p48, %p49
      %p51 = scmp.ne.s32.totalorder %s40, %s43
      %p52 = scmp.eq.s32.totalorder %s23, 1
      %p53 = por %p51, %p52
      %p54 = scmp.ne.s32.totalorder %s43, %s44
      %p55 = scmp.eq.s32.totalorder %s23, 0
      %p56 = por %p54, %p55
      %p57 = scmp.ne.s32.totalorder %s43, %s44
      %p58 = scmp.eq.s32.totalorder %s24, 1
      %p59 = por %p57, %p58
      %p61 = scmp.ne.s32.totalorder %s44, %s60
      %p62 = scmp.eq.s32.totalorder %s24, 0
      %p63 = por %p61, %p62
      %s64 = ssub.s32 %s26, %s33
      %p65 = scmp.eq.s32.totalorder %s64, 0
      %s67 = sadd.s32 %s66, 1
      %s68 = scalar_select %p65, %s66, %s67
      %p71 = pneg %p65
      %p72 = scmp.eq.s32.totalorder %s18, 1
      %p73 = por %p71, %p72
      %p74 = scmp.ne.s32.totalorder %s66, %s69
      %p75 = scmp.eq.s32.totalorder %s18, 0
      %p76 = por %p74, %p75
      %p77 = scmp.ne.s32.totalorder %s66, %s69
      %p78 = scmp.eq.s32.totalorder %s23, 1
      %p79 = por %p77, %p78
      %p80 = scmp.ne.s32.totalorder %s69, %s70
      %p81 = scmp.eq.s32.totalorder %s23, 0
      %p82 = por %p80, %p81
      %p83 = scmp.ne.s32.totalorder %s69, %s70
      %p84 = scmp.eq.s32.totalorder %s24, 1
      %p85 = por %p83, %p84
      %p87 = scmp.ne.s32.totalorder %s70, %s86
      %p88 = scmp.eq.s32.totalorder %s24, 0
      %p89 = por %p87, %p88
      %s90 = ssub.s32 %s26, %s33
      %p91 = scmp.eq.s32.totalorder %s90, 0
      %s93 = sadd.s32 %s92, 1
      %s94 = scalar_select %p91, %s92, %s93
      %p97 = pneg %p91
      %p98 = scmp.eq.s32.totalorder %s18, 1
      %p99 = por %p97, %p98
      %p100 = scmp.ne.s32.totalorder %s92, %s95
      %p101 = scmp.eq.s32.totalorder %s18, 0
      %p102 = por %p100, %p101
      %p103 = scmp.ne.s32.totalorder %s92, %s95
      %p104 = scmp.eq.s32.totalorder %s23, 1
      %p105 = por %p103, %p104
      %p106 = scmp.ne.s32.totalorder %s95, %s96
      %p107 = scmp.eq.s32.totalorder %s23, 0
      %p108 = por %p106, %p107
      %p109 = scmp.ne.s32.totalorder %s95, %s96
      %p110 = scmp.eq.s32.totalorder %s24, 1
      %p111 = por %p109, %p110
      %p113 = scmp.ne.s32.totalorder %s96, %s112
      %p114 = scmp.eq.s32.totalorder %s24, 0
      %p115 = por %p113, %p114
      %s116 = ssub.s32 %s26, %s33
      %p117 = scmp.eq.s32.totalorder %s116, 0
      %s119 = sadd.s32 %s118, 1
      %s120 = scalar_select %p117, %s118, %s119
      %p123 = pneg %p117
      %p124 = scmp.eq.s32.totalorder %s18, 1
      %p125 = por %p123, %p124
      %p126 = scmp.ne.s32.totalorder %s118, %s121
      %p127 = scmp.eq.s32.totalorder %s18, 0
      %p128 = por %p126, %p127
      %p129 = scmp.ne.s32.totalorder %s118, %s121
      %p130 = scmp.eq.s32.totalorder %s23, 1
      %p131 = por %p129, %p130
      %p132 = scmp.ne.s32.totalorder %s121, %s122
      %p133 = scmp.eq.s32.totalorder %s23, 0
      %p134 = por %p132, %p133
      %p135 = scmp.ne.s32.totalorder %s121, %s122
      %p136 = scmp.eq.s32.totalorder %s24, 1
      %p137 = por %p135, %p136
      %p139 = scmp.ne.s32.totalorder %s122, %s138
      %p140 = scmp.eq.s32.totalorder %s24, 0
      %p141 = por %p139, %p140
      %s143 = sadd.s32 %s142, 1
      %p146 = scmp.eq.s32.totalorder %s18, 1
      %p147 = scmp.ne.s32.totalorder %s142, %s144
      %p148 = scmp.eq.s32.totalorder %s18, 0
      %p149 = por %p147, %p148
      %p150 = scmp.ne.s32.totalorder %s142, %s144
      %p151 = scmp.eq.s32.totalorder %s23, 1
      %p152 = por %p150, %p151
      %p153 = scmp.ne.s32.totalorder %s144, %s145
      %p154 = scmp.eq.s32.totalorder %s23, 0
      %p155 = por %p153, %p154
      %p156 = scmp.ne.s32.totalorder %s144, %s145
      %p157 = scmp.eq.s32.totalorder %s24, 1
      %p158 = por %p156, %p157
      %p160 = scmp.ne.s32.totalorder %s145, %s159
      %p161 = scmp.eq.s32.totalorder %s24, 0
      %p162 = por %p160, %p161
      %s163 = ssub.s32 %s25, %s37
      %p164 = scmp.eq.s32.totalorder %s163, 0
      %s166 = sadd.s32 %s165, 1
      %s167 = scalar_select %p164, %s165, %s166
      %p170 = pneg %p164
      %p171 = scmp.eq.s32.totalorder %s18, 1
      %p172 = por %p170, %p171
      %p173 = scmp.ne.s32.totalorder %s165, %s168
      %p174 = scmp.eq.s32.totalorder %s18, 0
      %p175 = por %p173, %p174
      %p176 = scmp.ne.s32.totalorder %s165, %s168
      %p177 = scmp.eq.s32.totalorder %s23, 1
      %p178 = por %p176, %p177
      %p179 = scmp.ne.s32.totalorder %s168, %s169
      %p180 = scmp.eq.s32.totalorder %s23, 0
      %p181 = por %p179, %p180
      %p182 = scmp.ne.s32.totalorder %s168, %s169
      %p183 = scmp.eq.s32.totalorder %s24, 1
      %p184 = por %p182, %p183
      %p186 = scmp.ne.s32.totalorder %s169, %s185
      %p187 = scmp.eq.s32.totalorder %s24, 0
      %p188 = por %p186, %p187
      %p189 = scmp.le.s32.totalorder 1, %s18
      %p190 = scmp.lt.s32.totalorder %s18, 3
      %p191 = pnand %p189, %p190
      %p192 = pneg %p191
      // Predicated region
      $region9: #{tpu_custom_call.1} parent=5 // pred_check
        _
      $region10: #{tpu_custom_call.1} parent=5 // pred_check_branch
        %194 = sbr.rel (%p191) target = $region12
      $region11: #{tpu_custom_call.1} parent=5 // pred_region
        %s195 = ssub.s32 %s18, 1
        // Predicated region
        $region13: #{tpu_custom_call.1} parent=11 // pred_check
          %p196 = pneg %p82
        $region14: #{tpu_custom_call.1} parent=11 // pred_check_branch
          %198 = sbr.rel (%p196) target = $region16
        $region15: #{tpu_custom_call.1} parent=11 // pred_region
          %s200 = ssub.s32 2048, 2048
          %201 = vsyncadd [#allocation7], %s200
          %s202 = smul.addr %s28, 128
          %s203 = scalar_lea.hbm %s1, %s202
          %s204 = sshll.u32 [#allocation6], 4
          %s205 = int_to_ptr.vmem [resolvable:$true] %s204
          %210 = dma.hbm_to_vmem [thread:$0]  %s203, 2048, %s205, [#allocation7], 128, 128, 8
        $region16: #{tpu_custom_call.1} parent=11 // pred_fallthru
          _
        // Predicated region
        $region17: #{tpu_custom_call.1} parent=11 // pred_check
          %p211 = pneg %p108
        $region18: #{tpu_custom_call.1} parent=11 // pred_check_branch
          %213 = sbr.rel (%p211) target = $region20
        $region19: #{tpu_custom_call.1} parent=11 // pred_region
          %p214 = scmp.lt.s32.totalorder %s28, 0
          %s215 = scalar_select %p214, %s28, 0
          %s216 = scalar_lea.vmem %s2, %s215
        $region20: #{tpu_custom_call.1} parent=11 // pred_fallthru
          _
        // Predicated region
        $region21: #{tpu_custom_call.1} parent=11 // pred_check
          %p217 = pneg %p134
        $region22: #{tpu_custom_call.1} parent=11 // pred_check_branch
          %219 = sbr.rel (%p217) target = $region24
        $region23: #{tpu_custom_call.1} parent=11 // pred_region
          %s220 = smul.u32 16, %s28
          %s222 = ssub.s32 2048, 2048
          %223 = vsyncadd [#allocation7], %s222
          %s224 = smul.addr %s220, 128
          %s225 = scalar_lea.hbm %s3, %s224
          %s226 = sshll.u32 [#allocation8], 4
          %s227 = int_to_ptr.vmem [resolvable:$true] %s226
          %232 = dma.hbm_to_vmem [thread:$0]  %s225, 2048, %s227, [#allocation7], 128, 128, 8
        $region24: #{tpu_custom_call.1} parent=11 // pred_fallthru
          _
        // Predicated region
        $region25: #{tpu_custom_call.1} parent=11 // pred_check
          %p233 = pneg %p155
        $region26: #{tpu_custom_call.1} parent=11 // pred_check_branch
          %235 = sbr.rel (%p233) target = $region28
        $region27: #{tpu_custom_call.1} parent=11 // pred_region
          _
        $region28: #{tpu_custom_call.1} parent=11 // pred_fallthru
          _
      $region12: #{tpu_custom_call.1} parent=5 // pred_fallthru
        _
      %p236 = scmp.lt.s32.totalorder %s18, 2
      // Predicated region
      $region29: #{tpu_custom_call.1} parent=5 // pred_check
        %p237 = pneg %p236
      $region30: #{tpu_custom_call.1} parent=5 // pred_check_branch
        %239 = sbr.rel (%p237) target = $region32
      $region31: #{tpu_custom_call.1} parent=5 // pred_region
        // Predicated region
        $region33: #{tpu_custom_call.1} parent=31 // pred_check
          %p240 = pneg %p50
        $region34: #{tpu_custom_call.1} parent=31 // pred_check_branch
          %242 = sbr.rel (%p240) target = $region36
        $region35: #{tpu_custom_call.1} parent=31 // pred_region
          %s243 = sand.u32 %s40, 1
          %s244 = scalar_lea.sflag [#allocation4], %s243
          %s245 = sand.u32 %s40, 1
          %s246 = smul.addr %s245, 8
          %s247 = scalar_lea.vmem [#allocation3], %s246
          %s249 = ssub.s32 128, 128
          %250 = vsyncadd %s244, %s249
          %s251 = smul.addr %s25, 128
          %s252 = scalar_lea.hbm %s0, %s251
          %s254 = sshll.u32 %s247, 4
          %s255 = int_to_ptr.vmem [resolvable:$true] %s254
          %257 = dma.hbm_to_vmem [thread:$0]  %s252, 128, %s255, %s244
        $region36: #{tpu_custom_call.1} parent=31 // pred_fallthru
          _
      $region32: #{tpu_custom_call.1} parent=5 // pred_fallthru
        _
      %p258 = scmp.le.s32.totalorder 1, %s18
      %p259 = scmp.lt.s32.totalorder %s18, 3
      %p260 = pnand %p258, %p259
      %p261 = pneg %p260
      // Predicated region
      $region37: #{tpu_custom_call.1} parent=5 // pred_check
        _
      $region38: #{tpu_custom_call.1} parent=5 // pred_check_branch
        %263 = sbr.rel (%p260) target = $region40
      $region39: #{tpu_custom_call.1} parent=5 // pred_region
        %s264 = ssub.s32 %s18, 1
        %s265 = sand.u32 %s43, 1
        %s266 = scalar_lea.sflag [#allocation4], %s265
        %s267 = sand.u32 %s43, 1
        %s268 = smul.addr %s267, 8
        %s269 = scalar_lea.vmem [#allocation3], %s268
        // Predicated region
        $region41: #{tpu_custom_call.1} parent=39 // pred_check
          %p270 = pneg %p56
        $region42: #{tpu_custom_call.1} parent=39 // pred_check_branch
          %272 = sbr.rel (%p270) target = $region44
        $region43: #{tpu_custom_call.1} parent=39 // pred_region
          %273 = dma.done %s266, 128
        $region44: #{tpu_custom_call.1} parent=39 // pred_fallthru
          _
        // Predicated region
        $region45: #{tpu_custom_call.1} parent=39 // pred_check
          %p274 = pneg %p82
        $region46: #{tpu_custom_call.1} parent=39 // pred_check_branch
          %276 = sbr.rel (%p274) target = $region48
        $region47: #{tpu_custom_call.1} parent=39 // pred_region
          %277 = dma.done [#allocation7], 2048
        $region48: #{tpu_custom_call.1} parent=39 // pred_fallthru
          _
        // Predicated region
        $region49: #{tpu_custom_call.1} parent=39 // pred_check
          %p278 = pneg %p134
        $region50: #{tpu_custom_call.1} parent=39 // pred_check_branch
          %280 = sbr.rel (%p278) target = $region52
        $region51: #{tpu_custom_call.1} parent=39 // pred_region
          %281 = dma.done [#allocation7], 2048
        $region52: #{tpu_custom_call.1} parent=39 // pred_fallthru
          _
        %s282 = sand.u32 %s43, 1
        %s283 = scalar_lea.sflag [#allocation4], %s282
        %s284 = sand.u32 %s43, 1
        %s285 = smul.addr %s284, 8
        %s286 = scalar_lea.vmem [#allocation3], %s285
        %p287 = pneg %p56
        %p288 = pneg %p53
        %p289 = pneg %p82
        %p290 = pneg %p79
        %p291 = scmp.lt.s32.totalorder %s28, 0
        %s292 = scalar_select %p291, %s28, 0
        %s293 = scalar_lea.vmem %s2, %s292
        %p294 = pneg %p108
        %p295 = pneg %p105
        %p296 = pneg %p134
        %p297 = pneg %p131
        %p298 = pneg %p155
        %p299 = pneg %p152
        %p300 = pneg %p181
        %p301 = pneg %p178
        %s302 = sand.u32 %s168, 1
        %s303 = scalar_lea.sflag [#allocation5], %s302
        %s304 = sand.u32 %s168, 1
        %s305 = smul.addr %s304, 8
        %s306 = scalar_lea.vmem [#allocation9], %s305
        %p307 = scmp.lt.s32.totalorder %s28, 0
        %s308 = scalar_select %p307, %s28, 0
        %s309 = scalar_lea.vmem %s2, %s308
        %s310 = smul.u32 16, %s28
        %p311 = scmp.eq.s32.totalorder %s28, 0
        // Predicated region
        $region53: #{tpu_custom_call.1} parent=39 // pred_check
          %p312 = pneg %p311
        $region54: #{tpu_custom_call.1} parent=39 // pred_check_branch
          %314 = sbr.rel (%p312) target = $region56
        $region55: #{tpu_custom_call.1} parent=39 // pred_region
          %315 = vst [vmem:[#allocation2] sm:$0xff] 0.0
        $region56: #{tpu_custom_call.1} parent=39 // pred_fallthru
          _
        %v316 = vld [vmem:[%s269] sm:$0xff]
        %v317 = vld [vmem:[#allocation6] sm:$0xff]
        %v318 = vld [vmem:[#allocation6 + $0x8] sm:$0xff]
        %v319 = vld [vmem:[#allocation6 + $0x10] sm:$0xff]
        %v320 = vld [vmem:[#allocation6 + $0x18] sm:$0xff]
        %v321 = vld [vmem:[#allocation6 + $0x20] sm:$0xff]
        %v322 = vld [vmem:[#allocation6 + $0x28] sm:$0xff]
        %v323 = vld [vmem:[#allocation6 + $0x30] sm:$0xff]
        %v324 = vld [vmem:[#allocation6 + $0x38] sm:$0xff]
        %v325 = vld [vmem:[#allocation6 + $0x40] sm:$0xff]
        %v326 = vld [vmem:[#allocation6 + $0x48] sm:$0xff]
        %v327 = vld [vmem:[#allocation6 + $0x50] sm:$0xff]
        %v328 = vld [vmem:[#allocation6 + $0x58] sm:$0xff]
        %v329 = vld [vmem:[#allocation6 + $0x60] sm:$0xff]
        %v330 = vld [vmem:[#allocation6 + $0x68] sm:$0xff]
        %v331 = vld [vmem:[#allocation6 + $0x70] sm:$0xff]
        %v332 = vld [vmem:[#allocation6 + $0x78] sm:$0xff]
        %v333 = vld [vmem:[%s309] sm:$0x1]
        %v335 = vlaneseq
        %v336 = vshrl.u32 %v335, 7
        %v337 = vsub.s32 0, %v336
        %v338 = vrot.slane %v333, %v337
        %340 = vmatprep.subr.mxu0 0.0
        %341 = vmatpush1.msra.mxu0 %v317
        %342 = vmatprep.subr.mxu0 0.0
        %343 = vmatpush1.msra.mxu0 %v318
        %344 = vmatprep.subr.mxu0 0.0
        %345 = vmatpush1.msra.mxu0 %v319
        %346 = vmatprep.subr.mxu0 0.0
        %347 = vmatpush1.msra.mxu0 %v320
        %348 = vmatprep.subr.mxu0 0.0
        %349 = vmatpush1.msra.mxu0 %v321
        %350 = vmatprep.subr.mxu0 0.0
        %351 = vmatpush1.msra.mxu0 %v322
        %352 = vmatprep.subr.mxu0 0.0
        %353 = vmatpush1.msra.mxu0 %v323
        %354 = vmatprep.subr.mxu0 0.0
        %355 = vmatpush1.msra.mxu0 %v324
        %356 = vmatprep.subr.mxu0 0.0
        %357 = vmatpush1.msra.mxu0 %v325
        %358 = vmatprep.subr.mxu0 0.0
        %359 = vmatpush1.msra.mxu0 %v326
        %360 = vmatprep.subr.mxu0 0.0
        %361 = vmatpush1.msra.mxu0 %v327
        %362 = vmatprep.subr.mxu0 0.0
        %363 = vmatpush1.msra.mxu0 %v328
        %364 = vmatprep.subr.mxu0 0.0
        %365 = vmatpush1.msra.mxu0 %v329
        %366 = vmatprep.subr.mxu0 0.0
        %367 = vmatpush1.msra.mxu0 %v330
        %368 = vmatprep.subr.mxu0 0.0
        %369 = vmatpush1.msra.mxu0 %v331
        %370 = vmatprep.subr.mxu0 0.0
        %371 = vmatpush1.msra.mxu0 %v332
        %372 = vmatprep.subr.mxu0 0.0
        %373 = vmatpush1.msra.mxu0 0.0
        %374 = vmatprep.subr.mxu0 0.0
        %375 = vmatpush1.msra.mxu0 0.0
        %376 = vmatprep.subr.mxu0 0.0
        %377 = vmatpush1.msra.mxu0 0.0
        %378 = vmatprep.subr.mxu0 0.0
        %379 = vmatpush1.msra.mxu0 0.0
        %380 = vmatprep.subr.mxu0 0.0
        %381 = vmatpush1.msra.mxu0 0.0
        %382 = vmatprep.subr.mxu0 0.0
        %383 = vmatpush1.msra.mxu0 0.0
        %384 = vmatprep.subr.mxu0 0.0
        %385 = vmatpush1.msra.mxu0 0.0
        %386 = vmatprep.subr.mxu0 0.0
        %387 = vmatpush1.msra.mxu0 0.0
        %388 = vmatprep.subr.mxu0 0.0
        %389 = vmatpush1.msra.mxu0 0.0
        %390 = vmatprep.subr.mxu0 0.0
        %391 = vmatpush1.msra.mxu0 0.0
        %392 = vmatprep.subr.mxu0 0.0
        %393 = vmatpush1.msra.mxu0 0.0
        %394 = vmatprep.subr.mxu0 0.0
        %395 = vmatpush1.msra.mxu0 0.0
        %396 = vmatprep.subr.mxu0 0.0
        %397 = vmatpush1.msra.mxu0 0.0
        %398 = vmatprep.subr.mxu0 0.0
        %399 = vmatpush1.msra.mxu0 0.0
        %400 = vmatprep.subr.mxu0 0.0
        %401 = vmatpush1.msra.mxu0 0.0
        %402 = vmatprep.subr.mxu0 0.0
        %403 = vmatpush1.msra.mxu0 0.0
        %404 = vmatprep.mubr.f32.mxu0 0.0
        %405 = vmatmul.mubr.f32.gmra.mrb[0].mxu0 %v316
        %v406 = vpop.f32.mrb[0].mxu0
        %v407 = vadd.f32 %v338, %v406
        %v408 = vpop.f32.mrb[0].mxu0
        %409 = vdwg.mxu0
        %v410 = vxor.u32 %v407, 2147483648
        %v411 = vmul.f32 %v410, 1.442695
        %v412 = vpow.pop %v411
        %v413 = vadd.f32 %v412, 1.0
        %v414 = vrcp.pop %v413
        %v415 = vmul.f32 1.0, %v414
        %v416 = vmul.f32 %v407, %v415
        %v417 = vld [vmem:[#allocation2] sm:$0xff]
        %v418 = vld [vmem:[#allocation8] sm:$0xff]
        %v419 = vld [vmem:[#allocation8 + $0x8] sm:$0xff]
        %v420 = vld [vmem:[#allocation8 + $0x10] sm:$0xff]
        %v421 = vld [vmem:[#allocation8 + $0x18] sm:$0xff]
        %v422 = vld [vmem:[#allocation8 + $0x20] sm:$0xff]
        %v423 = vld [vmem:[#allocation8 + $0x28] sm:$0xff]
        %v424 = vld [vmem:[#allocation8 + $0x30] sm:$0xff]
        %v425 = vld [vmem:[#allocation8 + $0x38] sm:$0xff]
        %v426 = vld [vmem:[#allocation8 + $0x40] sm:$0xff]
        %v427 = vld [vmem:[#allocation8 + $0x48] sm:$0xff]
        %v428 = vld [vmem:[#allocation8 + $0x50] sm:$0xff]
        %v429 = vld [vmem:[#allocation8 + $0x58] sm:$0xff]
        %v430 = vld [vmem:[#allocation8 + $0x60] sm:$0xff]
        %v431 = vld [vmem:[#allocation8 + $0x68] sm:$0xff]
        %v432 = vld [vmem:[#allocation8 + $0x70] sm:$0xff]
        %v433 = vld [vmem:[#allocation8 + $0x78] sm:$0xff]
        %434 = vmatprep.subr.mxu0 0.0
        %435 = vmatpush1.msra.mxu0 %v418
        %436 = vmatprep.subr.mxu0 0.0
        %437 = vmatpush1.msra.mxu0 %v419
        %438 = vmatprep.subr.mxu0 0.0
        %439 = vmatpush1.msra.mxu0 %v420
        %440 = vmatprep.subr.mxu0 0.0
        %441 = vmatpush1.msra.mxu0 %v421
        %442 = vmatprep.subr.mxu0 0.0
        %443 = vmatpush1.msra.mxu0 %v422
        %444 = vmatprep.subr.mxu0 0.0
        %445 = vmatpush1.msra.mxu0 %v423
        %446 = vmatprep.subr.mxu0 0.0
        %447 = vmatpush1.msra.mxu0 %v424
        %448 = vmatprep.subr.mxu0 0.0
        %449 = vmatpush1.msra.mxu0 %v425
        %450 = vmatprep.subr.mxu0 0.0
        %451 = vmatpush1.msra.mxu0 %v426
        %452 = vmatprep.subr.mxu0 0.0
        %453 = vmatpush1.msra.mxu0 %v427
        %454 = vmatprep.subr.mxu0 0.0
        %455 = vmatpush1.msra.mxu0 %v428
        %456 = vmatprep.subr.mxu0 0.0
        %457 = vmatpush1.msra.mxu0 %v429
        %458 = vmatprep.subr.mxu0 0.0
        %459 = vmatpush1.msra.mxu0 %v430
        %460 = vmatprep.subr.mxu0 0.0
        %461 = vmatpush1.msra.mxu0 %v431
        %462 = vmatprep.subr.mxu0 0.0
        %463 = vmatpush1.msra.mxu0 %v432
        %464 = vmatprep.subr.mxu0 0.0
        %465 = vmatpush1.msra.mxu0 %v433
        %466 = vmatprep.subr.mxu0 0.0
        %467 = vmatpush1.msra.mxu0 0.0
        %468 = vmatprep.subr.mxu0 0.0
        %469 = vmatpush1.msra.mxu0 0.0
        %470 = vmatprep.subr.mxu0 0.0
        %471 = vmatpush1.msra.mxu0 0.0
        %472 = vmatprep.subr.mxu0 0.0
        %473 = vmatpush1.msra.mxu0 0.0
        %474 = vmatprep.subr.mxu0 0.0
        %475 = vmatpush1.msra.mxu0 0.0
        %476 = vmatprep.subr.mxu0 0.0
        %477 = vmatpush1.msra.mxu0 0.0
        %478 = vmatprep.subr.mxu0 0.0
        %479 = vmatpush1.msra.mxu0 0.0
        %480 = vmatprep.subr.mxu0 0.0
        %481 = vmatpush1.msra.mxu0 0.0
        %482 = vmatprep.subr.mxu0 0.0
        %483 = vmatpush1.msra.mxu0 0.0
        %484 = vmatprep.subr.mxu0 0.0
        %485 = vmatpush1.msra.mxu0 0.0
        %486 = vmatprep.subr.mxu0 0.0
        %487 = vmatpush1.msra.mxu0 0.0
        %488 = vmatprep.subr.mxu0 0.0
        %489 = vmatpush1.msra.mxu0 0.0
        %490 = vmatprep.subr.mxu0 0.0
        %491 = vmatpush1.msra.mxu0 0.0
        %492 = vmatprep.subr.mxu0 0.0
        %493 = vmatpush1.msra.mxu0 0.0
        %494 = vmatprep.subr.mxu0 0.0
        %495 = vmatpush1.msra.mxu0 0.0
        %496 = vmatprep.subr.mxu0 0.0
        %497 = vmatpush1.msra.mxu0 0.0
        %498 = vmatprep.mubr.f32.mxu0 0.0
        %499 = vmatmul.mubr.f32.gmra.mrb[0].mxu0 %v416
        %v500 = vpop.f32.mrb[0].mxu0
        %v501 = vadd.f32 0.0, %v500
        %v502 = vpop.f32.mrb[0].mxu0
        %503 = vdwg.mxu0
        %v504 = vadd.f32 %v417, %v501
        %505 = vst [vmem:[#allocation2] sm:$0xff] %v504
        // Predicated region
        $region57: #{tpu_custom_call.1} parent=39 // pred_check
          %p506 = pneg %p311
        $region58: #{tpu_custom_call.1} parent=39 // pred_check_branch
          %508 = sbr.rel (%p506) target = $region60
        $region59: #{tpu_custom_call.1} parent=39 // pred_region
          %v509 = vld [vmem:[#allocation2] sm:$0xff]
          %v510 = vld [vmem:[%s4] sm:$0x1]
          %v512 = vlaneseq
          %v513 = vshrl.u32 %v512, 7
          %v514 = vsub.s32 0, %v513
          %v515 = vrot.slane %v510, %v514
          %v517 = vadd.f32 %v509, %v515
          %518 = vst [vmem:[%s306] sm:$0xff] %v517
        $region60: #{tpu_custom_call.1} parent=39 // pred_fallthru
          _
        %s519 = sand.u32 %s168, 1
        %s520 = scalar_lea.sflag [#allocation5], %s519
        %s521 = sand.u32 %s168, 1
        %s522 = smul.addr %s521, 8
        %s523 = scalar_lea.vmem [#allocation9], %s522
        // Predicated region
        $region61: #{tpu_custom_call.1} parent=39 // pred_check
          %p524 = pneg %p178
        $region62: #{tpu_custom_call.1} parent=39 // pred_check_branch
          %526 = sbr.rel (%p524) target = $region64
        $region63: #{tpu_custom_call.1} parent=39 // pred_region
          %s528 = ssub.s32 128, 128
          %529 = vsyncadd %s520, %s528
          %s530 = smul.addr %s27, 128
          %s531 = scalar_lea.hbm %s5, %s530
          %s533 = sshll.u32 %s523, 4
          %s534 = int_to_ptr.vmem [resolvable:$true] %s533
          %536 = dma.vmem_to_hbm [thread:$0]  %s534, 128, %s531, %s520
        $region64: #{tpu_custom_call.1} parent=39 // pred_fallthru
          _
      $region40: #{tpu_custom_call.1} parent=5 // pred_fallthru
        _
      %p537 = scmp.le.s32.totalorder 2, %s18
      // Predicated region
      $region65: #{tpu_custom_call.1} parent=5 // pred_check
        %p538 = pneg %p537
      $region66: #{tpu_custom_call.1} parent=5 // pred_check_branch
        %540 = sbr.rel (%p538) target = $region68
      $region67: #{tpu_custom_call.1} parent=5 // pred_region
        %s541 = ssub.s32 %s18, 2
        // Predicated region
        $region69: #{tpu_custom_call.1} parent=67 // pred_check
          %p542 = pneg %p184
        $region70: #{tpu_custom_call.1} parent=67 // pred_check_branch
          %544 = sbr.rel (%p542) target = $region72
        $region71: #{tpu_custom_call.1} parent=67 // pred_region
          %s545 = sand.u32 %s169, 1
          %s546 = scalar_lea.sflag [#allocation5], %s545
          %s547 = sand.u32 %s169, 1
          %s548 = smul.addr %s547, 8
          %s549 = scalar_lea.vmem [#allocation9], %s548
          %550 = dma.done %s546, 128
        $region72: #{tpu_custom_call.1} parent=67 // pred_fallthru
          _
      $region68: #{tpu_custom_call.1} parent=5 // pred_fallthru
        _
    $region6: #{tpu_custom_call.1} parent=1 // loop_footer
      %s22 = sadd.s32 1, %s18
    $region7: #{tpu_custom_call.1} parent=1 // loop_footer_branch
      %17 = sbr.rel target = $region3
    $region8: #{tpu_custom_call.1} parent=1 // loop_exit
      _
    %551 = vsyncpa [#allocation4], 1
    %s552 = scalar_lea.sflag [#allocation4], 1
    %553 = vsyncpa %s552, 1
    %554 = vsyncpa [#allocation7], 1
    %555 = vsyncpa [#allocation5], 1
    %s556 = scalar_lea.sflag [#allocation5], 1
    %557 = vsyncpa %s556, 1

</llo_original>
